<compile_context>
chip_gen: v6e
topology: v6e:2x2x1
jax: 0.10.0
libtpu: 0.0.40
codegen_flags: <defaults>
</compile_context>

<pallas_src>
import jax
import jax.numpy as jnp
from jax.experimental import pallas as pl
from jax.experimental.pallas import tpu as pltpu


# ----------------------------- tiling helpers -----------------------------

def _round_up(x, m):
    return ((x + m - 1) // m) * m


def _pick_node_tiling(n, max_row_tile=512, max_k_tile=512):
    """Return (row_tile, k_tile, padded_n) for the node axis.

    n > max_row_tile : 512x512 tiles (padding waste capped at 511 rows,
                       k always tiled, multi-step grid for megacore).
    n <= max_row_tile: single k tile; split the row tile in two when the
                       padded size allows 16-row-aligned halves (bf16 adj
                       sublane packing) so v7x's two TCs both get work.
    """
    if n > max_row_tile:
        padded = _round_up(n, max_row_tile)          # row/k tiles both 512
        return max_row_tile, max_k_tile, padded
    padded = _round_up(n, 8)
    if padded % 32 == 0:
        return padded // 2, padded, padded           # >=2 row tiles, 16-aligned
    return padded, padded, padded


def _pad_rows(x, padded_n):
    pad = padded_n - x.shape[0]
    return x if pad == 0 else jnp.pad(x, ((0, pad), (0, 0)))


# ------------------------------- MLP kernel -------------------------------

def _mlp_kernel(x_ref, w1_ref, b1_ref, w2_ref, b2_ref, o_ref):
    h = jnp.dot(x_ref[...], w1_ref[...], preferred_element_type=jnp.float32)
    h = jnp.maximum(h + b1_ref[...], 0.0)                       # ReLU in f32
    h = jnp.dot(h.astype(w2_ref.dtype), w2_ref[...],
                preferred_element_type=jnp.float32)
    h = jnp.maximum(h + b2_ref[...], 0.0)
    o_ref[...] = h.astype(o_ref.dtype)


def mlp_forward(x, w1, b1, w2, b2, *, row_tile):
    rows, f_in = x.shape
    h1 = w1.shape[1]
    h2 = w2.shape[1]
    assert rows % row_tile == 0
    grid = (rows // row_tile,)
    return pl.pallas_call(
        _mlp_kernel,
        out_shape=jax.ShapeDtypeStruct((rows, h2), x.dtype),
        grid_spec=pltpu.PrefetchScalarGridSpec(
            num_scalar_prefetch=0,
            grid=grid,
            in_specs=[
                pl.BlockSpec((row_tile, f_in), lambda i: (i, 0)),
                pl.BlockSpec((f_in, h1), lambda i: (0, 0)),
                pl.BlockSpec((1, h1), lambda i: (0, 0)),
                pl.BlockSpec((h1, h2), lambda i: (0, 0)),
                pl.BlockSpec((1, h2), lambda i: (0, 0)),
            ],
            out_specs=pl.BlockSpec((row_tile, h2), lambda i: (i, 0)),
        ),
        compiler_params=pltpu.CompilerParams(dimension_semantics=("parallel",)),
    )(x, w1, b1.reshape(1, h1).astype(jnp.float32),
      w2, b2.reshape(1, h2).astype(jnp.float32))


# -------------------- fused (gf|gfs) GraphConv kernel -----------------------

def _graphconv_kernel(a_ref, x_ref, dk_ref, di_ref, w_ref, b_ref, o_ref,
                      acc_ref):
    # acc += A[i-block, k-block] @ (d_k^-1/2 * X[k-block, :])   (f32 accum)
    @pl.when(pl.program_id(1) == 0)
    def _():
        acc_ref[...] = jnp.zeros_like(acc_ref)

    x_scaled = x_ref[...].astype(jnp.float32) * dk_ref[...]
    acc_ref[...] += jnp.dot(a_ref[...].astype(jnp.float32), x_scaled,
                            preferred_element_type=jnp.float32)

    @pl.when(pl.program_id(1) == pl.num_programs(1) - 1)
    def _():
        f_in = w_ref.shape[0]
        agg = acc_ref[...] * di_ref[...]              # d_i^-1/2 row scaling
        # Shared weight applied to each fused half ([gf | gfs]).
        h1 = jnp.dot(agg[:, :f_in].astype(w_ref.dtype), w_ref[...],
                     preferred_element_type=jnp.float32)
        h2 = jnp.dot(agg[:, f_in:].astype(w_ref.dtype), w_ref[...],
                     preferred_element_type=jnp.float32)
        b = b_ref[...]
        h = jnp.concatenate([h1 + b, h2 + b], axis=-1)
        o_ref[...] = jnp.maximum(h, 0.0).astype(o_ref.dtype)


def graphconv_fused_forward(adj_b, x2, d_inv_sqrt, w, b, *, row_tile, k_tile,
                            vmem_limit_bytes=32 * 1024 * 1024):
    """One GraphConv layer applied to the fused feature slab X = [gf | gfs].

    adj_b      : (n, n) binary adjacency in bf16 (exact 0/1)
    x2         : (n, 2*f_in) fused features
    d_inv_sqrt : (n, 1) f32 degree^-1/2 (0 for isolated / padded rows)
    """
    n = adj_b.shape[0]
    two_f_in = x2.shape[1]
    f_in, f_out = w.shape
    assert two_f_in == 2 * f_in
    assert adj_b.shape == (n, n) and x2.shape[0] == n
    assert d_inv_sqrt.shape == (n, 1)
    assert n % row_tile == 0 and n % k_tile == 0
    grid = (n // row_tile, n // k_tile)
    return pl.pallas_call(
        _graphconv_kernel,
        out_shape=jax.ShapeDtypeStruct((n, 2 * f_out), x2.dtype),
        grid_spec=pltpu.PrefetchScalarGridSpec(
            num_scalar_prefetch=0,
            grid=grid,
            in_specs=[
                pl.BlockSpec((row_tile, k_tile), lambda i, k: (i, k)),   # adj bf16
                pl.BlockSpec((k_tile, two_f_in), lambda i, k: (k, 0)),   # [gf|gfs]
                pl.BlockSpec((k_tile, 1), lambda i, k: (k, 0)),          # d^-1/2 (k)
                pl.BlockSpec((row_tile, 1), lambda i, k: (i, 0)),        # d^-1/2 (i)
                pl.BlockSpec((f_in, f_out), lambda i, k: (0, 0)),
                pl.BlockSpec((1, f_out), lambda i, k: (0, 0)),
            ],
            out_specs=pl.BlockSpec((row_tile, 2 * f_out), lambda i, k: (i, 0)),
            scratch_shapes=[pltpu.VMEM((row_tile, two_f_in), jnp.float32)],
        ),
        compiler_params=pltpu.CompilerParams(
            dimension_semantics=("parallel", "arbitrary"),
            vmem_limit_bytes=vmem_limit_bytes),
    )(adj_b, x2, d_inv_sqrt, d_inv_sqrt, w,
      b.reshape(1, f_out).astype(jnp.float32))


# ----------------------- Bilinear discriminator kernel ---------------------

def _bilinear_disc_kernel(ha_ref, has_ref, hg2_ref, w_ref, b_ref, o_ref):
    # Bilinear(x1, x2) with out_features=1:  sum_j ((x1 @ W) * x2)_j + b
    hg_dim = w_ref.shape[1]
    hgc = hg2_ref[...].astype(jnp.float32)
    hg = hgc[:, :hg_dim]
    hgs = hgc[:, hg_dim:]
    t1 = jnp.dot(ha_ref[...], w_ref[...], preferred_element_type=jnp.float32)
    t2 = jnp.dot(has_ref[...], w_ref[...], preferred_element_type=jnp.float32)
    b = b_ref[0]                                          # SMEM scalar
    l1 = jnp.sum(t1 * hg, axis=-1, keepdims=True) + b
    l2 = jnp.sum(t2 * hg, axis=-1, keepdims=True) + b
    l3 = jnp.sum(t1 * hgs, axis=-1, keepdims=True) + b
    l4 = jnp.sum(t2 * hgs, axis=-1, keepdims=True) + b
    o_ref[...] = jnp.concatenate([l1, l2, l3, l4], axis=-1).astype(o_ref.dtype)


def bilinear_disc_forward(h_attr2, h_graph2, w, b, *, row_tile, n_row_tiles):
    """h_attr2: (2*n, Ha) = [h_attr ; h_attr_shfs] stacked on rows.
    h_graph2: (n, 2*Hg)  = [h_graph | h_graph_shfs] fused on lanes."""
    rows2, ha_dim = h_attr2.shape
    n = h_graph2.shape[0]
    hg_dim = w.shape[1]
    assert w.shape == (ha_dim, hg_dim)
    assert h_graph2.shape[1] == 2 * hg_dim
    assert rows2 == 2 * n and n == n_row_tiles * row_tile
    grid = (n_row_tiles,)
    b_smem = jnp.asarray(b, jnp.float32).reshape(1)
    return pl.pallas_call(
        _bilinear_disc_kernel,
        out_shape=jax.ShapeDtypeStruct((n, 4), jnp.float32),
        grid_spec=pltpu.PrefetchScalarGridSpec(
            num_scalar_prefetch=0,
            grid=grid,
            in_specs=[
                pl.BlockSpec((row_tile, ha_dim), lambda i: (i, 0)),
                pl.BlockSpec((row_tile, ha_dim),
                             lambda i: (i + n_row_tiles, 0)),
                pl.BlockSpec((row_tile, 2 * hg_dim), lambda i: (i, 0)),
                pl.BlockSpec((ha_dim, hg_dim), lambda i: (0, 0)),
                pl.BlockSpec(memory_space=pltpu.MemorySpace.SMEM),
            ],
            out_specs=pl.BlockSpec((row_tile, 4), lambda i: (i, 0)),
        ),
        compiler_params=pltpu.CompilerParams(dimension_semantics=("parallel",)),
    )(h_attr2, h_attr2, h_graph2, w, b_smem)


# ----------------------------- full forward --------------------------------

def contrast_ad_forward(adj, graph_feat, graph_feat_shfs, attr_feat,
                        attr_feat_shfs, params, *, max_row_tile=512):
    """adj is the *raw* (binary, with self-loops) adjacency; the DGL GraphConv
    norm='both' D^-1/2 A D^-1/2 scaling is folded into the kernels."""
    n = adj.shape[0]
    row_tile, k_tile, padded_n = _pick_node_tiling(n, max_row_tile)
    pad_n = padded_n - n
    f32 = jnp.float32

    # Binary adjacency streamed as bf16 (0/1 exact) -> half the dominant HBM read.
    adj_b = jnp.pad(adj, ((0, pad_n), (0, pad_n))).astype(jnp.bfloat16)
    deg = jnp.sum(adj.astype(f32), axis=1)
    d_inv_sqrt = jnp.where(deg > 0,
                           1.0 / jnp.sqrt(jnp.where(deg > 0, deg, 1.0)), 0.0)
    dis = jnp.pad(d_inv_sqrt, (0, pad_n)).reshape(padded_n, 1).astype(f32)

    # Fuse gf/gfs along lanes for the graph encoder; af/afs along rows for MLP.
    gf2 = jnp.concatenate([_pad_rows(graph_feat, padded_n),
                           _pad_rows(graph_feat_shfs, padded_n)],
                          axis=-1).astype(f32)
    attr2 = jnp.concatenate([_pad_rows(attr_feat, padded_n),
                             _pad_rows(attr_feat_shfs, padded_n)],
                            axis=0).astype(f32)

    # Attribute MLP (one call over 2*padded_n rows).
    h_attr2 = mlp_forward(attr2,
                          params["mlp_w1"].astype(f32), params["mlp_b1"],
                          params["mlp_w2"].astype(f32), params["mlp_b2"],
                          row_tile=row_tile)

    # Two GraphConv layers over the fused [gf | gfs] slab (adjacency read 2x
    # total instead of 4x).
    h1 = graphconv_fused_forward(adj_b, gf2, dis,
                                 params["gc1_w"].astype(f32), params["gc1_b"],
                                 row_tile=row_tile, k_tile=k_tile)
    h2 = graphconv_fused_forward(adj_b, h1, dis,
                                 params["gc2_w"].astype(f32), params["gc2_b"],
                                 row_tile=row_tile, k_tile=k_tile)

    # Padded rows carry ReLU(bias) activations; they are sliced off below and
    # never reduced over.
    logits = bilinear_disc_forward(h_attr2, h2,
                                   params["disc_w"].astype(f32),
                                   params["disc_b"],
                                   row_tile=row_tile,
                                   n_row_tiles=padded_n // row_tile)
    return logits[:n]


# --------------------------- params / reference ----------------------------

def init_params(key, graph_feat_size, attr_feat_size, graph_hidden, attr_hidden):
    ks = jax.random.split(key, 7)

    def xavier(k, shape):
        lim = jnp.sqrt(6.0 / (shape[0] + shape[1]))
        return jax.random.uniform(k, shape, jnp.float32, -lim, lim)

    lim1 = 1.0 / jnp.sqrt(attr_feat_size)
    lim2 = 1.0 / jnp.sqrt(attr_hidden)
    return {
        # attribute MLP (weights pre-transposed: (in, out))
        "mlp_w1": jax.random.uniform(ks[0], (attr_feat_size, attr_hidden),
                                     jnp.float32, -lim1, lim1),
        "mlp_b1": jax.random.uniform(ks[1], (attr_hidden,), jnp.float32, -lim1, lim1),
        "mlp_w2": jax.random.uniform(ks[2], (attr_hidden, attr_hidden),
                                     jnp.float32, -lim2, lim2),
        "mlp_b2": jax.random.uniform(ks[3], (attr_hidden,), jnp.float32, -lim2, lim2),
        # GraphConv layers (xavier weights, zero bias like DGL defaults)
        "gc1_w": xavier(ks[4], (graph_feat_size, graph_hidden)),
        "gc1_b": jnp.zeros((graph_hidden,), jnp.float32),
        "gc2_w": xavier(ks[5], (graph_hidden, graph_hidden)),
        "gc2_b": jnp.zeros((graph_hidden,), jnp.float32),
        # nn.Bilinear(attr_hidden, graph_hidden, 1): xavier weight, zero bias
        "disc_w": xavier(ks[6], (attr_hidden, graph_hidden)),
        "disc_b": jnp.zeros((), jnp.float32),
    }


def _reference(adj, gf, gfs, af, afs, p):
    deg = jnp.sum(adj, axis=1)
    d = jnp.where(deg > 0, 1.0 / jnp.sqrt(jnp.where(deg > 0, deg, 1.0)), 0.0)
    adj_norm = adj * d[:, None] * d[None, :]

    def mlp(x):
        h = jnp.maximum(x @ p["mlp_w1"] + p["mlp_b1"], 0.0)
        return jnp.maximum(h @ p["mlp_w2"] + p["mlp_b2"], 0.0)

    def gc(x, w, b):
        return jnp.maximum((adj_norm @ x) @ w + b, 0.0)

    def encode(x):
        return gc(gc(x, p["gc1_w"], p["gc1_b"]), p["gc2_w"], p["gc2_b"])

    def bilinear(x1, x2):
        return jnp.sum((x1 @ p["disc_w"]) * x2, axis=-1, keepdims=True) + p["disc_b"]

    ha, has_ = mlp(af), mlp(afs)
    hg, hgs = encode(gf), encode(gfs)
    return jnp.concatenate([bilinear(ha, hg), bilinear(has_, hg),
                            bilinear(ha, hgs), bilinear(has_, hgs)], axis=-1)


# ---------------------------------- main -----------------------------------

if __name__ == "__main__":
    key = jax.random.PRNGKey(0)
    k_gf, k_gfs, k_af, k_afs, k_p = jax.random.split(key, 5)

    num_nodes = 16
    graph_feat_size, attr_feat_size = 16, 16
    graph_hidden, attr_hidden = 32, 32

    # Deterministic small graph: ring + self loops (symmetric, binary).
    idx = jnp.arange(num_nodes)
    adj = jnp.zeros((num_nodes, num_nodes), jnp.float32)
    adj = adj.at[idx, idx].set(1.0)
    adj = adj.at[idx, (idx + 1) % num_nodes].set(1.0)
    adj = adj.at[(idx + 1) % num_nodes, idx].set(1.0)

    graph_feat = jax.random.normal(k_gf, (num_nodes, graph_feat_size), jnp.float32)
    graph_feat_shfs = jax.random.normal(k_gfs, (num_nodes, graph_feat_size), jnp.float32)
    attr_feat = jax.random.normal(k_af, (num_nodes, attr_feat_size), jnp.float32)
    attr_feat_shfs = jax.random.normal(k_afs, (num_nodes, attr_feat_size), jnp.float32)

    params = init_params(k_p, graph_feat_size, attr_feat_size,
                         graph_hidden, attr_hidden)

    out = contrast_ad_forward(adj, graph_feat, graph_feat_shfs,
                              attr_feat, attr_feat_shfs, params)
    out = jax.block_until_ready(out)

    ref = _reference(adj, graph_feat, graph_feat_shfs,
                     attr_feat, attr_feat_shfs, params)
    assert out.shape == (num_nodes, 4), out.shape
    assert jnp.allclose(out, ref, atol=1e-3, rtol=1e-3), (out, ref)

    print("KERNEL_OK")
</pallas_src>

<mosaic_0001>
module attributes {stable_mosaic.version = 11 : i64} {
  func.func @_mlp_kernel(%arg0: i32, %arg1: memref<16x16xf32, #tpu.memory_space<vmem>>, %arg2: memref<16x32xf32, #tpu.memory_space<vmem>>, %arg3: memref<1x32xf32, #tpu.memory_space<vmem>>, %arg4: memref<32x32xf32, #tpu.memory_space<vmem>>, %arg5: memref<1x32xf32, #tpu.memory_space<vmem>>, %arg6: memref<16x32xf32, #tpu.memory_space<vmem>>) attributes {dimension_semantics = [#tpu.dimension_semantics<parallel>], iteration_bounds = array<i64: 2>, scalar_prefetch = 0 : i64, scratch_operands = 0 : i64, tpu.core_type = #tpu.core_type<tc>, window_params = [{transform_indices = @transform_0, window_bounds = array<i64: 16, 16>}, {pipeline_mode = #tpu.pipeline_mode<synchronous>, transform_indices = @transform_1, window_bounds = array<i64: 16, 32>}, {pipeline_mode = #tpu.pipeline_mode<synchronous>, transform_indices = @transform_2, window_bounds = array<i64: 1, 32>}, {pipeline_mode = #tpu.pipeline_mode<synchronous>, transform_indices = @transform_3, window_bounds = array<i64: 32, 32>}, {pipeline_mode = #tpu.pipeline_mode<synchronous>, transform_indices = @transform_4, window_bounds = array<i64: 1, 32>}, {transform_indices = @transform_5, window_bounds = array<i64: 16, 32>}]} {
    %c0 = arith.constant 0 : index
    %c0_0 = arith.constant 0 : index
    %0 = vector.load %arg1[%c0, %c0_0] : memref<16x16xf32, #tpu.memory_space<vmem>>, vector<16x16xf32>
    %c0_1 = arith.constant 0 : index
    %c0_2 = arith.constant 0 : index
    %1 = vector.load %arg2[%c0_1, %c0_2] : memref<16x32xf32, #tpu.memory_space<vmem>>, vector<16x32xf32>
    %cst = arith.constant dense<0.000000e+00> : vector<16x32xf32>
    %2 = tpu.matmul %0, %1, %cst {dimension_numbers = #tpu.dot_dimension_numbers<[1], [0], [0], [1], [0, 0, 1, 1], [], []>} : vector<16x16xf32>, vector<16x32xf32>, vector<16x32xf32> -> vector<16x32xf32>
    %c0_3 = arith.constant 0 : index
    %c0_4 = arith.constant 0 : index
    %3 = vector.load %arg3[%c0_3, %c0_4] : memref<1x32xf32, #tpu.memory_space<vmem>>, vector<1x32xf32>
    %4 = vector.broadcast %3 : vector<1x32xf32> to vector<16x32xf32>
    %5 = arith.addf %2, %4 : vector<16x32xf32>
    %cst_5 = arith.constant 0.000000e+00 : f32
    %6 = vector.broadcast %cst_5 : f32 to vector<16x32xf32>
    %7 = arith.maximumf %5, %6 : vector<16x32xf32>
    %c0_6 = arith.constant 0 : index
    %c0_7 = arith.constant 0 : index
    %8 = vector.load %arg4[%c0_6, %c0_7] : memref<32x32xf32, #tpu.memory_space<vmem>>, vector<32x32xf32>
    %cst_8 = arith.constant dense<0.000000e+00> : vector<16x32xf32>
    %9 = tpu.matmul %7, %8, %cst_8 {dimension_numbers = #tpu.dot_dimension_numbers<[1], [0], [0], [1], [0, 0, 1, 1], [], []>} : vector<16x32xf32>, vector<32x32xf32>, vector<16x32xf32> -> vector<16x32xf32>
    %c0_9 = arith.constant 0 : index
    %c0_10 = arith.constant 0 : index
    %10 = vector.load %arg5[%c0_9, %c0_10] : memref<1x32xf32, #tpu.memory_space<vmem>>, vector<1x32xf32>
    %11 = vector.broadcast %10 : vector<1x32xf32> to vector<16x32xf32>
    %12 = arith.addf %9, %11 : vector<16x32xf32>
    %cst_11 = arith.constant 0.000000e+00 : f32
    %13 = vector.broadcast %cst_11 : f32 to vector<16x32xf32>
    %14 = arith.maximumf %12, %13 : vector<16x32xf32>
    %c0_12 = arith.constant 0 : index
    %c0_13 = arith.constant 0 : index
    %15 = vector.load %arg6[%c0_12, %c0_13] : memref<16x32xf32, #tpu.memory_space<vmem>>, vector<16x32xf32>
    tpu.vector_store %arg6[%c0_12, %c0_13], %14 {strides = array<i32>} : memref<16x32xf32, #tpu.memory_space<vmem>>, vector<16x32xf32>,
    return
  }
  func.func @transform_0(%arg0: i32) -> (i32, i32) {
    %c0_i32 = arith.constant 0 : i32
    %c0_i32_0 = arith.constant 0 : i32
    return %arg0, %c0_i32 : i32, i32
  }
  func.func @transform_1(%arg0: i32) -> (i32, i32) {
    %c0_i32 = arith.constant 0 : i32
    %c0_i32_0 = arith.constant 0 : i32
    %c0_i32_1 = arith.constant 0 : i32
    return %c0_i32, %c0_i32_0 : i32, i32
  }
  func.func @transform_2(%arg0: i32) -> (i32, i32) {
    %c0_i32 = arith.constant 0 : i32
    %c0_i32_0 = arith.constant 0 : i32
    %c0_i32_1 = arith.constant 0 : i32
    return %c0_i32, %c0_i32_0 : i32, i32
  }
  func.func @transform_3(%arg0: i32) -> (i32, i32) {
    %c0_i32 = arith.constant 0 : i32
    %c0_i32_0 = arith.constant 0 : i32
    %c0_i32_1 = arith.constant 0 : i32
    return %c0_i32, %c0_i32_0 : i32, i32
  }
  func.func @transform_4(%arg0: i32) -> (i32, i32) {
    %c0_i32 = arith.constant 0 : i32
    %c0_i32_0 = arith.constant 0 : i32
    %c0_i32_1 = arith.constant 0 : i32
    return %c0_i32, %c0_i32_0 : i32, i32
  }
  func.func @transform_5(%arg0: i32) -> (i32, i32) {
    %c0_i32 = arith.constant 0 : i32
    %c0_i32_0 = arith.constant 0 : i32
    return %arg0, %c0_i32 : i32, i32
  }
}

</mosaic_0001>

<llo_original>
// kernel: tpu_custom_call.1
$region0: #{tpu_custom_call.1}
  #allocation0 [shape = 'u32[]', space=smem, size = 0x4, offset = 0x4, fixed_abs, tag = 'smem constant byte address 0x4 - core index']
  #allocation1 [shape = 'u32[144,128]{1,0:T(1,128)}', space=vmem, size = 0x12000, scoped, tag = 'internal scratch']
  %s0 = inlined_call_operand.vmem [shape: f32[32,16], index: 0, kind: input, shape index: {}]
  %s1 = inlined_call_operand.vmem [shape: f32[16,32], index: 1, kind: input, shape index: {}]
  %s2 = inlined_call_operand.vmem [shape: f32[1,32], index: 2, kind: input, shape index: {}]
  %s3 = inlined_call_operand.vmem [shape: f32[32,32], index: 3, kind: input, shape index: {}]
  %s4 = inlined_call_operand.vmem [shape: f32[1,32], index: 4, kind: input, shape index: {}]
  %s5 = inlined_call_operand.hbm [shape: f32[32,32], index: 5, kind: output, shape index: {}]
  %s6 = sld [smem:[#allocation0]]
  $region53: #{tpu_custom_call.1} parent=0
    _
  %s8 = ssub.s32 1, %s6
  %s9 = scalar_select 0, %s8, %s6
  $region1: #{tpu_custom_call.1} parent=0
    #allocation2 [shape = 'u8[16384]{0}', space=vmem, size = 0x4000, scoped, tag = 'output window, operand 0']
    #allocation3 [shape = 's32[2]{0}', space=sflag, size = 0x8, scoped, tag = 'scoped memory for tpu_custom_call.1']
    %10 = vsyncpa [#allocation3], 0
    %s11 = scalar_lea.sflag [#allocation3], 1
    %12 = vsyncpa %s11, 0
    loop: start=0, step=1, limit=4
    $region2: #{tpu_custom_call.1} parent=1 // loop_pre_header
      _
    $region3: #{tpu_custom_call.1} parent=1 // loop_header
      %s14 = sphi 0, %s18
      %p15 = scmp.ge.s32.totalorder %s14, 4
      %s24 = sphi 0, %s26
      %s27 = sphi 0, %s24
      %s28 = sphi 0, %s27
      %s44 = sphi 0, %s28
      %s48 = sphi 0, %s48
      %s50 = sphi 0, %s48
      %s51 = sphi 0, %s50
      %s65 = sphi 0, %s51
      %s69 = sphi 0, %s69
      %s71 = sphi 0, %s69
      %s72 = sphi 0, %s71
      %s86 = sphi 0, %s72
      %s90 = sphi 0, %s90
      %s92 = sphi 0, %s90
      %s93 = sphi 0, %s92
      %s107 = sphi 0, %s93
      %s111 = sphi 0, %s111
      %s113 = sphi 0, %s111
      %s114 = sphi 0, %s113
      %s128 = sphi 0, %s114
      %s134 = sphi 0, %s136
      %s137 = sphi 0, %s134
      %s138 = sphi 0, %s137
      %s154 = sphi 0, %s138
    $region4: #{tpu_custom_call.1} parent=1 // loop_header_branch
      %17 = sbr.rel (%p15) target = $region8
    $region5: #{tpu_custom_call.1} parent=1 // loop_body
      %s19 = ssub.s32 %s14, 1
      %s20 = ssub.s32 %s14, 2
      %s21 = sadd.s32 %s14, 1
      %s22 = ssub.s32 %s14, %s21
      %p23 = scmp.eq.s32.totalorder %s22, 0
      %s25 = sadd.s32 %s24, 1
      %s26 = scalar_select %p23, %s24, %s25
      %p29 = pneg %p23
      %p30 = scmp.eq.s32.totalorder %s14, 1
      %p31 = por %p29, %p30
      %p32 = scmp.ne.s32.totalorder %s24, %s27
      %p33 = scmp.eq.s32.totalorder %s14, 0
      %p34 = por %p32, %p33
      %p35 = scmp.ne.s32.totalorder %s24, %s27
      %p36 = scmp.eq.s32.totalorder %s19, 1
      %p37 = por %p35, %p36
      %p38 = scmp.ne.s32.totalorder %s27, %s28
      %p39 = scmp.eq.s32.totalorder %s19, 0
      %p40 = por %p38, %p39
      %p41 = scmp.ne.s32.totalorder %s27, %s28
      %p42 = scmp.eq.s32.totalorder %s20, 1
      %p43 = por %p41, %p42
      %p45 = scmp.ne.s32.totalorder %s28, %s44
      %p46 = scmp.eq.s32.totalorder %s20, 0
      %p47 = por %p45, %p46
      %s49 = sadd.s32 %s48, 1
      %p52 = scmp.eq.s32.totalorder %s14, 1
      %p53 = scmp.ne.s32.totalorder %s48, %s50
      %p54 = scmp.eq.s32.totalorder %s14, 0
      %p55 = por %p53, %p54
      %p56 = scmp.ne.s32.totalorder %s48, %s50
      %p57 = scmp.eq.s32.totalorder %s19, 1
      %p58 = por %p56, %p57
      %p59 = scmp.ne.s32.totalorder %s50, %s51
      %p60 = scmp.eq.s32.totalorder %s19, 0
      %p61 = por %p59, %p60
      %p62 = scmp.ne.s32.totalorder %s50, %s51
      %p63 = scmp.eq.s32.totalorder %s20, 1
      %p64 = por %p62, %p63
      %p66 = scmp.ne.s32.totalorder %s51, %s65
      %p67 = scmp.eq.s32.totalorder %s20, 0
      %p68 = por %p66, %p67
      %s70 = sadd.s32 %s69, 1
      %p73 = scmp.eq.s32.totalorder %s14, 1
      %p74 = scmp.ne.s32.totalorder %s69, %s71
      %p75 = scmp.eq.s32.totalorder %s14, 0
      %p76 = por %p74, %p75
      %p77 = scmp.ne.s32.totalorder %s69, %s71
      %p78 = scmp.eq.s32.totalorder %s19, 1
      %p79 = por %p77, %p78
      %p80 = scmp.ne.s32.totalorder %s71, %s72
      %p81 = scmp.eq.s32.totalorder %s19, 0
      %p82 = por %p80, %p81
      %p83 = scmp.ne.s32.totalorder %s71, %s72
      %p84 = scmp.eq.s32.totalorder %s20, 1
      %p85 = por %p83, %p84
      %p87 = scmp.ne.s32.totalorder %s72, %s86
      %p88 = scmp.eq.s32.totalorder %s20, 0
      %p89 = por %p87, %p88
      %s91 = sadd.s32 %s90, 1
      %p94 = scmp.eq.s32.totalorder %s14, 1
      %p95 = scmp.ne.s32.totalorder %s90, %s92
      %p96 = scmp.eq.s32.totalorder %s14, 0
      %p97 = por %p95, %p96
      %p98 = scmp.ne.s32.totalorder %s90, %s92
      %p99 = scmp.eq.s32.totalorder %s19, 1
      %p100 = por %p98, %p99
      %p101 = scmp.ne.s32.totalorder %s92, %s93
      %p102 = scmp.eq.s32.totalorder %s19, 0
      %p103 = por %p101, %p102
      %p104 = scmp.ne.s32.totalorder %s92, %s93
      %p105 = scmp.eq.s32.totalorder %s20, 1
      %p106 = por %p104, %p105
      %p108 = scmp.ne.s32.totalorder %s93, %s107
      %p109 = scmp.eq.s32.totalorder %s20, 0
      %p110 = por %p108, %p109
      %s112 = sadd.s32 %s111, 1
      %p115 = scmp.eq.s32.totalorder %s14, 1
      %p116 = scmp.ne.s32.totalorder %s111, %s113
      %p117 = scmp.eq.s32.totalorder %s14, 0
      %p118 = por %p116, %p117
      %p119 = scmp.ne.s32.totalorder %s111, %s113
      %p120 = scmp.eq.s32.totalorder %s19, 1
      %p121 = por %p119, %p120
      %p122 = scmp.ne.s32.totalorder %s113, %s114
      %p123 = scmp.eq.s32.totalorder %s19, 0
      %p124 = por %p122, %p123
      %p125 = scmp.ne.s32.totalorder %s113, %s114
      %p126 = scmp.eq.s32.totalorder %s20, 1
      %p127 = por %p125, %p126
      %p129 = scmp.ne.s32.totalorder %s114, %s128
      %p130 = scmp.eq.s32.totalorder %s20, 0
      %p131 = por %p129, %p130
      %s132 = ssub.s32 %s14, %s21
      %p133 = scmp.eq.s32.totalorder %s132, 0
      %s135 = sadd.s32 %s134, 1
      %s136 = scalar_select %p133, %s134, %s135
      %p139 = pneg %p133
      %p140 = scmp.eq.s32.totalorder %s14, 1
      %p141 = por %p139, %p140
      %p142 = scmp.ne.s32.totalorder %s134, %s137
      %p143 = scmp.eq.s32.totalorder %s14, 0
      %p144 = por %p142, %p143
      %p145 = scmp.ne.s32.totalorder %s134, %s137
      %p146 = scmp.eq.s32.totalorder %s19, 1
      %p147 = por %p145, %p146
      %p148 = scmp.ne.s32.totalorder %s137, %s138
      %p149 = scmp.eq.s32.totalorder %s19, 0
      %p150 = por %p148, %p149
      %p151 = scmp.ne.s32.totalorder %s137, %s138
      %p152 = scmp.eq.s32.totalorder %s20, 1
      %p153 = por %p151, %p152
      %p155 = scmp.ne.s32.totalorder %s138, %s154
      %p156 = scmp.eq.s32.totalorder %s20, 0
      %p157 = por %p155, %p156
      %p158 = scmp.le.s32.totalorder 1, %s14
      %p159 = scmp.lt.s32.totalorder %s14, 3
      %p160 = pnand %p158, %p159
      %p161 = pneg %p160
      // Predicated region
      $region9: #{tpu_custom_call.1} parent=5 // pred_check
        _
      $region10: #{tpu_custom_call.1} parent=5 // pred_check_branch
        %163 = sbr.rel (%p160) target = $region12
      $region11: #{tpu_custom_call.1} parent=5 // pred_region
        %s164 = ssub.s32 %s14, 1
        // Predicated region
        $region13: #{tpu_custom_call.1} parent=11 // pred_check
          %p165 = pneg %p61
        $region14: #{tpu_custom_call.1} parent=11 // pred_check_branch
          %167 = sbr.rel (%p165) target = $region16
        $region15: #{tpu_custom_call.1} parent=11 // pred_region
          _
        $region16: #{tpu_custom_call.1} parent=11 // pred_fallthru
          _
        // Predicated region
        $region17: #{tpu_custom_call.1} parent=11 // pred_check
          %p168 = pneg %p82
        $region18: #{tpu_custom_call.1} parent=11 // pred_check_branch
          %170 = sbr.rel (%p168) target = $region20
        $region19: #{tpu_custom_call.1} parent=11 // pred_region
          _
        $region20: #{tpu_custom_call.1} parent=11 // pred_fallthru
          _
        // Predicated region
        $region21: #{tpu_custom_call.1} parent=11 // pred_check
          %p171 = pneg %p103
        $region22: #{tpu_custom_call.1} parent=11 // pred_check_branch
          %173 = sbr.rel (%p171) target = $region24
        $region23: #{tpu_custom_call.1} parent=11 // pred_region
          _
        $region24: #{tpu_custom_call.1} parent=11 // pred_fallthru
          _
        // Predicated region
        $region25: #{tpu_custom_call.1} parent=11 // pred_check
          %p174 = pneg %p124
        $region26: #{tpu_custom_call.1} parent=11 // pred_check_branch
          %176 = sbr.rel (%p174) target = $region28
        $region27: #{tpu_custom_call.1} parent=11 // pred_region
          _
        $region28: #{tpu_custom_call.1} parent=11 // pred_fallthru
          _
      $region12: #{tpu_custom_call.1} parent=5 // pred_fallthru
        _
      %p177 = scmp.lt.s32.totalorder %s14, 2
      // Predicated region
      $region29: #{tpu_custom_call.1} parent=5 // pred_check
        %p178 = pneg %p177
      $region30: #{tpu_custom_call.1} parent=5 // pred_check_branch
        %180 = sbr.rel (%p178) target = $region32
      $region31: #{tpu_custom_call.1} parent=5 // pred_region
        // Predicated region
        $region33: #{tpu_custom_call.1} parent=31 // pred_check
          %p181 = pneg %p34
        $region34: #{tpu_custom_call.1} parent=31 // pred_check_branch
          %183 = sbr.rel (%p181) target = $region36
        $region35: #{tpu_custom_call.1} parent=31 // pred_region
          %s184 = smul.u32 2, %s14
          %p185 = scmp.lt.s32.totalorder %s184, 3
          %s186 = scalar_select %p185, %s184, 3
          %s187 = smul.addr %s186, 8
          %s188 = scalar_lea.vmem %s0, %s187
          %s189 = smul.u32 2, %s14
        $region36: #{tpu_custom_call.1} parent=31 // pred_fallthru
          _
      $region32: #{tpu_custom_call.1} parent=5 // pred_fallthru
        _
      %p190 = scmp.le.s32.totalorder 1, %s14
      %p191 = scmp.lt.s32.totalorder %s14, 3
      %p192 = pnand %p190, %p191
      %p193 = pneg %p192
      // Predicated region
      $region37: #{tpu_custom_call.1} parent=5 // pred_check
        _
      $region38: #{tpu_custom_call.1} parent=5 // pred_check_branch
        %195 = sbr.rel (%p192) target = $region40
      $region39: #{tpu_custom_call.1} parent=5 // pred_region
        %s196 = ssub.s32 %s14, 1
        %s197 = smul.u32 2, %s19
        %p198 = scmp.lt.s32.totalorder %s197, 3
        %s199 = scalar_select %p198, %s197, 3
        %s200 = smul.addr %s199, 8
        %s201 = scalar_lea.vmem %s0, %s200
        %p202 = pneg %p40
        %p203 = pneg %p37
        %p204 = pneg %p61
        %p205 = pneg %p58
        %p206 = pneg %p82
        %p207 = pneg %p79
        %p208 = pneg %p103
        %p209 = pneg %p100
        %p210 = pneg %p124
        %p211 = pneg %p121
        %p212 = pneg %p150
        %p213 = pneg %p147
        %s214 = sand.u32 %s137, 1
        %s215 = scalar_lea.sflag [#allocation3], %s214
        %s216 = sand.u32 %s137, 1
        %s217 = smul.addr %s216, 16
        %s218 = scalar_lea.vmem [#allocation2], %s217
        %s219 = smul.u32 2, %s19
        %p220 = scmp.lt.s32.totalorder %s219, 3
        %s221 = scalar_select %p220, %s219, 3
        %s222 = smul.addr %s221, 8
        %s223 = scalar_lea.vmem %s0, %s222
        %s224 = smul.u32 2, %s19
        %s225 = smul.u32 2, %s19
        %v226 = vld [vmem:[%s223] sm:$0xff]
        %v227 = vld [vmem:[%s223 + $0x8] sm:$0xff]
        %v228 = vld [vmem:[%s1] sm:$0xff]
        %v229 = vld [vmem:[%s1 + $0x8] sm:$0xff]
        %v230 = vld [vmem:[%s2] sm:$0x1]
        %v232 = vlaneseq
        %v233 = vshrl.u32 %v232, 7
        %v234 = vsub.s32 0, %v233
        %v235 = vrot.slane %v230, %v234
        %vm237 = vcmask 130048
        %v239 = vsel %vm237, %v226, 0
        %v242 = vsel %vm237, %v227, 0
        %244 = vmatprep.subr.mxu0 0.0
        %245 = vmatpush1.msra.mxu0 0.0
        %246 = vmatprep.subr.mxu0 0.0
        %247 = vmatpush1.msra.mxu0 0.0
        %248 = vmatprep.subr.mxu0 0.0
        %249 = vmatpush1.msra.mxu0 0.0
        %250 = vmatprep.subr.mxu0 0.0
        %251 = vmatpush1.msra.mxu0 0.0
        %252 = vmatprep.subr.mxu0 0.0
        %253 = vmatpush1.msra.mxu0 0.0
        %254 = vmatprep.subr.mxu0 0.0
        %255 = vmatpush1.msra.mxu0 0.0
        %256 = vmatprep.subr.mxu0 0.0
        %257 = vmatpush1.msra.mxu0 0.0
        %258 = vmatprep.subr.mxu0 0.0
        %259 = vmatpush1.msra.mxu0 0.0
        %260 = vmatprep.subr.mxu0 0.0
        %261 = vmatpush1.msra.mxu0 0.0
        %262 = vmatprep.subr.mxu0 0.0
        %263 = vmatpush1.msra.mxu0 0.0
        %264 = vmatprep.subr.mxu0 0.0
        %265 = vmatpush1.msra.mxu0 0.0
        %266 = vmatprep.subr.mxu0 0.0
        %267 = vmatpush1.msra.mxu0 0.0
        %268 = vmatprep.subr.mxu0 0.0
        %269 = vmatpush1.msra.mxu0 0.0
        %270 = vmatprep.subr.mxu0 0.0
        %271 = vmatpush1.msra.mxu0 0.0
        %272 = vmatprep.subr.mxu0 0.0
        %273 = vmatpush1.msra.mxu0 %v229
        %274 = vmatprep.subr.mxu0 0.0
        %275 = vmatpush1.msra.mxu0 %v228
        %276 = vmatprep.subr.mxu0 0.0
        %277 = vmatpush2.msra.mxu0 0.0
        %278 = vmatprep.subr.mxu0 0.0
        %279 = vmatpush2.msra.mxu0 0.0
        %280 = vmatprep.subr.mxu0 0.0
        %281 = vmatpush2.msra.mxu0 0.0
        %282 = vmatprep.subr.mxu0 0.0
        %283 = vmatpush2.msra.mxu0 0.0
        %284 = vmatprep.subr.mxu0 0.0
        %285 = vmatpush2.msra.mxu0 0.0
        %286 = vmatprep.subr.mxu0 0.0
        %287 = vmatpush2.msra.mxu0 0.0
        %288 = vmatprep.subr.mxu0 0.0
        %289 = vmatpush2.msra.mxu0 0.0
        %290 = vmatprep.subr.mxu0 0.0
        %291 = vmatpush2.msra.mxu0 0.0
        %292 = vmatprep.subr.mxu0 0.0
        %293 = vmatpush2.msra.mxu0 0.0
        %294 = vmatprep.subr.mxu0 0.0
        %295 = vmatpush2.msra.mxu0 0.0
        %296 = vmatprep.subr.mxu0 0.0
        %297 = vmatpush2.msra.mxu0 0.0
        %298 = vmatprep.subr.mxu0 0.0
        %299 = vmatpush2.msra.mxu0 0.0
        %300 = vmatprep.subr.mxu0 0.0
        %301 = vmatpush2.msra.mxu0 0.0
        %302 = vmatprep.subr.mxu0 0.0
        %303 = vmatpush2.msra.mxu0 0.0
        %304 = vmatprep.subr.mxu0 0.0
        %305 = vmatpush2.msra.mxu0 0.0
        %306 = vmatprep.subr.mxu0 0.0
        %307 = vmatpush2.msra.mxu0 0.0
        %308 = vmatprep.mubr.f32.mxu0 0.0
        %309 = vmatmul.mubr.f32.gmra.mxu0 %v239
        %v310 = vpop.f32.mrf.mxu0
        %v311 = vadd.f32 %v235, %v310
        %v312 = vpop.f32.mrf.mxu0
        %313 = vmatprep.mubr.f32.mxu0 0.0
        %314 = vmatmul.mubr.f32.gmra.mxu0 %v242
        %v315 = vpop.f32.mrf.mxu0
        %v316 = vadd.f32 %v235, %v315
        %v317 = vpop.f32.mrf.mxu0
        %318 = vdwg.mxu0
        %v319 = vmax.f32 %v311, 0.0
        %v320 = vmax.f32 %v316, 0.0
        %v321 = vld [vmem:[%s3] sm:$0xff]
        %v322 = vld [vmem:[%s3 + $0x8] sm:$0xff]
        %v323 = vld [vmem:[%s3 + $0x10] sm:$0xff]
        %v324 = vld [vmem:[%s3 + $0x18] sm:$0xff]
        %v325 = vld [vmem:[%s4] sm:$0x1]
        %v327 = vlaneseq
        %v328 = vshrl.u32 %v327, 7
        %v329 = vsub.s32 0, %v328
        %v330 = vrot.slane %v325, %v329
        %vm332 = vcmask 261120
        %v334 = vsel %vm332, %v319, 0
        %v337 = vsel %vm332, %v320, 0
        %339 = vmatprep.subr.mxu0 0.0
        %340 = vmatpush1.msra.mxu0 0.0
        %341 = vmatprep.subr.mxu0 0.0
        %342 = vmatpush1.msra.mxu0 0.0
        %343 = vmatprep.subr.mxu0 0.0
        %344 = vmatpush1.msra.mxu0 0.0
        %345 = vmatprep.subr.mxu0 0.0
        %346 = vmatpush1.msra.mxu0 0.0
        %347 = vmatprep.subr.mxu0 0.0
        %348 = vmatpush1.msra.mxu0 0.0
        %349 = vmatprep.subr.mxu0 0.0
        %350 = vmatpush1.msra.mxu0 0.0
        %351 = vmatprep.subr.mxu0 0.0
        %352 = vmatpush1.msra.mxu0 0.0
        %353 = vmatprep.subr.mxu0 0.0
        %354 = vmatpush1.msra.mxu0 0.0
        %355 = vmatprep.subr.mxu0 0.0
        %356 = vmatpush1.msra.mxu0 0.0
        %357 = vmatprep.subr.mxu0 0.0
        %358 = vmatpush1.msra.mxu0 0.0
        %359 = vmatprep.subr.mxu0 0.0
        %360 = vmatpush1.msra.mxu0 0.0
        %361 = vmatprep.subr.mxu0 0.0
        %362 = vmatpush1.msra.mxu0 0.0
        %363 = vmatprep.subr.mxu0 0.0
        %364 = vmatpush1.msra.mxu0 %v324
        %365 = vmatprep.subr.mxu0 0.0
        %366 = vmatpush1.msra.mxu0 %v323
        %367 = vmatprep.subr.mxu0 0.0
        %368 = vmatpush1.msra.mxu0 %v322
        %369 = vmatprep.subr.mxu0 0.0
        %370 = vmatpush1.msra.mxu0 %v321
        %371 = vmatprep.subr.mxu0 0.0
        %372 = vmatpush2.msra.mxu0 0.0
        %373 = vmatprep.subr.mxu0 0.0
        %374 = vmatpush2.msra.mxu0 0.0
        %375 = vmatprep.subr.mxu0 0.0
        %376 = vmatpush2.msra.mxu0 0.0
        %377 = vmatprep.subr.mxu0 0.0
        %378 = vmatpush2.msra.mxu0 0.0
        %379 = vmatprep.subr.mxu0 0.0
        %380 = vmatpush2.msra.mxu0 0.0
        %381 = vmatprep.subr.mxu0 0.0
        %382 = vmatpush2.msra.mxu0 0.0
        %383 = vmatprep.subr.mxu0 0.0
        %384 = vmatpush2.msra.mxu0 0.0
        %385 = vmatprep.subr.mxu0 0.0
        %386 = vmatpush2.msra.mxu0 0.0
        %387 = vmatprep.subr.mxu0 0.0
        %388 = vmatpush2.msra.mxu0 0.0
        %389 = vmatprep.subr.mxu0 0.0
        %390 = vmatpush2.msra.mxu0 0.0
        %391 = vmatprep.subr.mxu0 0.0
        %392 = vmatpush2.msra.mxu0 0.0
        %393 = vmatprep.subr.mxu0 0.0
        %394 = vmatpush2.msra.mxu0 0.0
        %395 = vmatprep.subr.mxu0 0.0
        %396 = vmatpush2.msra.mxu0 0.0
        %397 = vmatprep.subr.mxu0 0.0
        %398 = vmatpush2.msra.mxu0 0.0
        %399 = vmatprep.subr.mxu0 0.0
        %400 = vmatpush2.msra.mxu0 0.0
        %401 = vmatprep.subr.mxu0 0.0
        %402 = vmatpush2.msra.mxu0 0.0
        %403 = vmatprep.mubr.f32.mxu0 0.0
        %404 = vmatmul.mubr.f32.gmra.mxu0 %v334
        %v405 = vpop.f32.mrf.mxu0
        %v406 = vadd.f32 %v330, %v405
        %v407 = vpop.f32.mrf.mxu0
        %408 = vmatprep.mubr.f32.mxu0 0.0
        %409 = vmatmul.mubr.f32.gmra.mxu0 %v337
        %v410 = vpop.f32.mrf.mxu0
        %v411 = vadd.f32 %v330, %v410
        %v412 = vpop.f32.mrf.mxu0
        %413 = vdwg.mxu0
        %v414 = vmax.f32 %v406, 0.0
        %v415 = vmax.f32 %v411, 0.0
        %416 = vst.msk [vmem:[%s218] sm:$0xff] %vm332, %v414
        %417 = vst.msk [vmem:[%s218 + $0x8] sm:$0xff] %vm332, %v415
        %s418 = sand.u32 %s137, 1
        %s419 = scalar_lea.sflag [#allocation3], %s418
        %s420 = sand.u32 %s137, 1
        %s421 = smul.addr %s420, 16
        %s422 = scalar_lea.vmem [#allocation2], %s421
        // Predicated region
        $region41: #{tpu_custom_call.1} parent=39 // pred_check
          %p423 = pneg %p147
        $region42: #{tpu_custom_call.1} parent=39 // pred_check_branch
          %425 = sbr.rel (%p423) target = $region44
        $region43: #{tpu_custom_call.1} parent=39 // pred_region
          %s426 = smul.u32 2, %s19
          %s428 = ssub.s32 256, 256
          %429 = vsyncadd %s419, %s428
          %s430 = smul.addr %s426, 128
          %s431 = scalar_lea.hbm %s5, %s430
          %s432 = sshll.u32 %s422, 4
          %s433 = int_to_ptr.vmem [resolvable:$true] %s432
          %438 = dma.vmem_to_hbm [thread:$0]  %s433, 256, %s431, %s419, 128, 128, 8
        $region44: #{tpu_custom_call.1} parent=39 // pred_fallthru
          _
      $region40: #{tpu_custom_call.1} parent=5 // pred_fallthru
        _
      %p439 = scmp.le.s32.totalorder 2, %s14
      // Predicated region
      $region45: #{tpu_custom_call.1} parent=5 // pred_check
        %p440 = pneg %p439
      $region46: #{tpu_custom_call.1} parent=5 // pred_check_branch
        %442 = sbr.rel (%p440) target = $region48
      $region47: #{tpu_custom_call.1} parent=5 // pred_region
        %s443 = ssub.s32 %s14, 2
        // Predicated region
        $region49: #{tpu_custom_call.1} parent=47 // pred_check
          %p444 = pneg %p153
        $region50: #{tpu_custom_call.1} parent=47 // pred_check_branch
          %446 = sbr.rel (%p444) target = $region52
        $region51: #{tpu_custom_call.1} parent=47 // pred_region
          %s447 = sand.u32 %s138, 1
          %s448 = scalar_lea.sflag [#allocation3], %s447
          %s449 = sand.u32 %s138, 1
          %s450 = smul.addr %s449, 16
          %s451 = scalar_lea.vmem [#allocation2], %s450
          %452 = dma.done %s448, 256
        $region52: #{tpu_custom_call.1} parent=47 // pred_fallthru
          _
      $region48: #{tpu_custom_call.1} parent=5 // pred_fallthru
        _
    $region6: #{tpu_custom_call.1} parent=1 // loop_footer
      %s18 = sadd.s32 1, %s14
    $region7: #{tpu_custom_call.1} parent=1 // loop_footer_branch
      %13 = sbr.rel target = $region3
    $region8: #{tpu_custom_call.1} parent=1 // loop_exit
      _
    %453 = vsyncpa [#allocation3], 1
    %s454 = scalar_lea.sflag [#allocation3], 1
    %455 = vsyncpa %s454, 1

</llo_original>
